<compile_context>
chip_gen: v5e
topology: v5e:2x2
jax: 0.10.0
libtpu: 0.0.40
codegen_flags: <defaults>
</compile_context>

<pallas_src>
import functools

import jax
import jax.numpy as jnp
from jax.experimental import pallas as pl
from jax.experimental.pallas import tpu as pltpu

LANE_WIDTHS = (1024, 512, 256, 128)   # candidate slab widths (multiples of 128)
_MIB = 1 << 20


def _chip_config():
    """Best-effort TPU generation detection: TensorCore count + max tile rows."""
    kind = ""
    try:
        kind = jax.devices()[0].device_kind.lower()
    except Exception:
        pass
    if "v7" in kind or "7x" in kind:            # 2 TensorCores / chip
        return {"num_cores": 2, "max_tile_r": 1024}
    if "v6" in kind:                             # 1 TC, 32 MiB scoped default
        return {"num_cores": 1, "max_tile_r": 1024}
    return {"num_cores": 1, "max_tile_r": 512}   # v5e / unknown: conservative


def _vae_loss_kernel(dist_ref, out_ref, tgt_ref, recon_ref, entr_ref, acc_ref,
                     *, rows, tile_r, acc_rows, tiles_per_core, m_inv,
                     mask_rows, multi_core):
    if multi_core:
        c = pl.program_id(0)
        i = pl.program_id(1)
        n_i = pl.num_programs(1)
    else:
        c = None
        i = pl.program_id(0)
        n_i = pl.num_programs(0)

    # --- init the per-core accumulator at the start of the reduction axis ---
    @pl.when(i == 0)
    def _():
        acc_ref[...] = jnp.zeros_like(acc_ref)

    # --- pure-VPU inner step: upcast in-kernel, square, fold into 8 sublanes --
    diff = out_ref[...].astype(jnp.float32) - tgt_ref[...].astype(jnp.float32)
    sq = diff * diff
    if mask_rows:
        # Only emitted when the grid over-covers the row range: zero the
        # contribution of rows past the end (and of clamped phantom tiles).
        tile_idx = (c * tiles_per_core + i) if multi_core else i
        row0 = tile_idx * tile_r
        rid = row0 + jax.lax.broadcasted_iota(jnp.int32, (tile_r, 1), 0)
        sq = jnp.where(rid < rows, sq, 0.0)
    if acc_rows == tile_r:
        acc_ref[...] += sq
    else:
        # Fold (tile_r, W) -> (8, W): splits the leading dim only, so it stays
        # vreg-aligned and lowers to VALU adds (no XLU in the hot loop).
        acc_ref[...] += jnp.sum(
            sq.reshape(tile_r // acc_rows, acc_rows, sq.shape[-1]), axis=0)

    # --- finalize once per core: XLU reduce + (core-0 only) entropy ----------
    last = i == n_i - 1

    @pl.when(last)
    def _():
        recon_ref[0] = jnp.sum(acc_ref[...], axis=(0, 1), keepdims=True)  # (1,1)

    entr_now = (last & (c == 0)) if multi_core else last

    @pl.when(entr_now)
    def _():
        d = dist_ref[...].astype(jnp.float32) + 1e-7            # (B, M, N)
        en = (-d) * jnp.log(d)
        s = jnp.sum(jnp.sum(en, axis=2), axis=1, keepdims=True)  # (B, 1)
        entr_ref[0] = s * m_inv                                   # / M

    if multi_core:
        # Explicitly zero the unused entropy blocks of the other core(s).
        @pl.when(last & (c != 0))
        def _():
            entr_ref[...] = jnp.zeros_like(entr_ref)


def vae_loss(dist, outputs, targets, lam, *,
             _force_cores=None, _force_max_tile_r=None):
    """Returns (loss, loss_recon, loss_entr) matching the PyTorch VAELoss."""
    assert outputs.shape == targets.shape
    B, M, N = dist.shape
    total = int(outputs.size)

    cfg = _chip_config()
    num_cores_req = _force_cores if _force_cores is not None else cfg["num_cores"]
    max_tile_r = _force_max_tile_r if _force_max_tile_r is not None else cfg["max_tile_r"]

    # ---- lane-dense 2D slab: zero-copy reshape, no jnp.pad of the bulk ------
    flat_out = outputs.reshape(-1)
    flat_tgt = targets.reshape(-1)
    width = next((w for w in LANE_WIDTHS if total % w == 0 and total >= w), None)
    if width is None:
        # Rare fallback (element count not a multiple of 128): pad the tail.
        # Padded zeros contribute 0 to the sum of squares; we divide by `total`.
        # TODO(synk): replace with an in-kernel element mask to avoid this copy.
        width = 128
        pad = (-total) % width
        flat_out = jnp.pad(flat_out, (0, pad))
        flat_tgt = jnp.pad(flat_tgt, (0, pad))
    rows = flat_out.size // width
    out2d = flat_out.reshape(rows, width)
    tgt2d = flat_tgt.reshape(rows, width)

    # ---- tile size: as large as VMEM allows, dtype-aware sublane multiple ---
    itemsizes = [jnp.dtype(outputs.dtype).itemsize, jnp.dtype(targets.dtype).itemsize]
    sublane = max({1: 32, 2: 16}.get(s, 8) for s in itemsizes)
    if rows <= max_tile_r:
        tile_r = rows                               # full dim: exempt from (8,·) rule
    else:
        tile_r = max(sublane, (max_tile_r // sublane) * sublane)
    total_tiles = -(-rows // tile_r)
    num_cores = max(1, min(num_cores_req, total_tiles))
    tiles_per_core = -(-total_tiles // num_cores)
    mask_rows = (num_cores * tiles_per_core * tile_r) != rows
    acc_rows = 8 if (tile_r % 8 == 0) else tile_r

    # ---- grid + specs --------------------------------------------------------
    last_tile = total_tiles - 1
    if num_cores > 1:
        grid = (num_cores, tiles_per_core)

        def data_map(c, i):
            # Clamp phantom (fully out-of-range) tiles onto the last real tile;
            # the in-kernel row mask zeroes their contribution.
            return (jnp.minimum(c * tiles_per_core + i, last_tile), 0)

        dist_map = lambda c, i: (0, 0, 0)
        part_map = lambda c, i: (c, 0, 0)
    else:
        grid = (tiles_per_core,)
        data_map = lambda i: (i, 0)
        dist_map = lambda i: (0, 0, 0)
        part_map = lambda i: (0, 0, 0)

    in_specs = [
        pl.BlockSpec((B, M, N), dist_map),          # tiny, resident, DMA'd once
        pl.BlockSpec((tile_r, width), data_map),
        pl.BlockSpec((tile_r, width), data_map),
    ]
    out_specs = (
        pl.BlockSpec((1, 1, 1), part_map),          # per-core sum of squares
        pl.BlockSpec((1, B, 1), part_map),          # entropy (core 0 only)
    )
    out_shape = (
        jax.ShapeDtypeStruct((num_cores, 1, 1), jnp.float32),
        jax.ShapeDtypeStruct((num_cores, B, 1), jnp.float32),
    )

    # ---- VMEM budget + cost estimate -----------------------------------------
    in_tile_bytes = tile_r * width * max(itemsizes)
    dist_bytes = int(dist.size) * jnp.dtype(dist.dtype).itemsize
    acc_bytes = acc_rows * width * 4
    vmem_needed = 4 * in_tile_bytes + 2 * dist_bytes + acc_bytes + 8 * _MIB
    vmem_limit = int(min(max(vmem_needed, 16 * _MIB), 40 * _MIB))
    cost = pl.CostEstimate(
        flops=int(3 * total + 4 * dist.size),
        transcendentals=int(dist.size),
        bytes_accessed=int(total * (itemsizes[0] + itemsizes[1]) + dist_bytes
                           + 4 * num_cores * (1 + B)),
    )

    kernel = functools.partial(
        _vae_loss_kernel,
        rows=rows, tile_r=tile_r, acc_rows=acc_rows,
        tiles_per_core=tiles_per_core, m_inv=float(1.0 / M),
        mask_rows=mask_rows, multi_core=(num_cores > 1))

    def _call(dim_sems):
        return pl.pallas_call(
            kernel,
            grid=grid,
            in_specs=in_specs,
            out_specs=out_specs,
            out_shape=out_shape,
            scratch_shapes=[pltpu.VMEM((acc_rows, width), jnp.float32)],
            compiler_params=pltpu.CompilerParams(
                dimension_semantics=dim_sems,
                vmem_limit_bytes=vmem_limit),
            cost_estimate=cost,
        )(dist, out2d, tgt2d)

    if num_cores > 1:
        try:
            # Force the 2-TensorCore split on v7x (plain "parallel" is not
            # guaranteed to change codegen).
            recon_part, entr_part = _call((pltpu.CORE_PARALLEL, pltpu.ARBITRARY))
        except Exception:
            recon_part, entr_part = _call((pltpu.PARALLEL, pltpu.ARBITRARY))
    else:
        recon_part, entr_part = _call((pltpu.ARBITRARY,))

    # Tiny O(B) combine in XLA: normalize the partial sums and form the loss.
    loss_recon = jnp.sum(recon_part) * (1.0 / total)
    loss_entr = entr_part[0, :, 0]
    loss = loss_recon - lam * loss_entr
    return loss, loss_recon, loss_entr


def _ref_vae_loss(dist, outputs, targets, lam):
    """Pure-JAX reference reproducing the PyTorch forward."""
    loss_recon = jnp.mean((outputs - targets) ** 2)
    d = dist + 1e-7
    en = (-d) * jnp.log(d)
    en_z = jnp.sum(jnp.sum(en, axis=-1), axis=-1) / en.shape[-2]
    loss = loss_recon - lam * en_z
    return loss, loss_recon, en_z


if __name__ == "__main__":
    key = jax.random.PRNGKey(0)
    lam = 0.5

    def _check(shape_out, shape_dist, seed_offset=0, **kw):
        k1, k2, k3 = jax.random.split(jax.random.fold_in(key, seed_offset), 3)
        outputs = jax.random.normal(k1, shape_out, dtype=jnp.float32)
        targets = jax.random.normal(k2, shape_out, dtype=jnp.float32)
        dist = jax.nn.softmax(
            jax.random.normal(k3, shape_dist, dtype=jnp.float32), axis=-1)
        got = jax.block_until_ready(vae_loss(dist, outputs, targets, lam, **kw))
        want = _ref_vae_loss(dist, outputs, targets, lam)
        for g, w in zip(got, want):
            assert jnp.allclose(g, w, atol=1e-5, rtol=1e-5), (g, w)

    # Main case: batch=2, channels=4, spatial=16 (shapes the module implies).
    _check((2, 4, 16, 16), (2, 8, 16))
    # Multi-tile + ragged last tile: exercises the in-kernel row mask and the
    # folded (8, W) accumulator path.
    _check((2, 5, 64, 64), (2, 8, 16), seed_offset=1, _force_max_tile_r=16)
    # Exercise the multi-TensorCore (v7x) code path: per-core partials,
    # clamped index map, and the zeroed entropy block on core 1.
    _check((2, 5, 64, 64), (2, 8, 16), seed_offset=2,
           _force_max_tile_r=16, _force_cores=2)

    print("KERNEL_OK")
</pallas_src>

<mosaic_0001>
module attributes {stable_mosaic.version = 11 : i64} {
  func.func @_vae_loss_kernel(%arg0: i32, %arg1: memref<2x8x16xf32, #tpu.memory_space<vmem>>, %arg2: memref<2x1024xf32, #tpu.memory_space<vmem>>, %arg3: memref<2x1024xf32, #tpu.memory_space<vmem>>, %arg4: memref<1x1x1xf32, #tpu.memory_space<vmem>>, %arg5: memref<1x2x1xf32, #tpu.memory_space<vmem>>, %arg6: memref<2x1024xf32, #tpu.memory_space<vmem>>) attributes {dimension_semantics = [#tpu.dimension_semantics<arbitrary>], iteration_bounds = array<i64: 1>, scalar_prefetch = 0 : i64, scratch_operands = 1 : i64, tpu.core_type = #tpu.core_type<tc>, window_params = [{pipeline_mode = #tpu.pipeline_mode<synchronous>, transform_indices = @transform_0, window_bounds = array<i64: 2, 8, 16>}, {transform_indices = @transform_1, window_bounds = array<i64: 2, 1024>}, {transform_indices = @transform_2, window_bounds = array<i64: 2, 1024>}, {pipeline_mode = #tpu.pipeline_mode<synchronous>, transform_indices = @transform_3, window_bounds = array<i64: 1, 1, 1>}, {pipeline_mode = #tpu.pipeline_mode<synchronous>, transform_indices = @transform_4, window_bounds = array<i64: 1, 2, 1>}]} {
    %c0_i32 = arith.constant 0 : i32
    %0 = arith.cmpi eq, %arg0, %c0_i32 : i32
    %1 = arith.extui %0 : i1 to i32
    %c0_i32_0 = arith.constant 0 : i32
    %2 = arith.cmpi ne, %1, %c0_i32_0 : i32
    scf.if %2 {
      %cst = arith.constant 0.000000e+00 : f32
      %15 = vector.broadcast %cst : f32 to vector<2x1024xf32>
      %c0_11 = arith.constant 0 : index
      %c0_12 = arith.constant 0 : index
      %16 = vector.load %arg6[%c0_11, %c0_12] : memref<2x1024xf32, #tpu.memory_space<vmem>>, vector<2x1024xf32>
      tpu.vector_store %arg6[%c0_11, %c0_12], %15 {strides = array<i32>} : memref<2x1024xf32, #tpu.memory_space<vmem>>, vector<2x1024xf32>,
    } else {
    }
    %c0 = arith.constant 0 : index
    %c0_1 = arith.constant 0 : index
    %3 = vector.load %arg2[%c0, %c0_1] : memref<2x1024xf32, #tpu.memory_space<vmem>>, vector<2x1024xf32>
    %c0_2 = arith.constant 0 : index
    %c0_3 = arith.constant 0 : index
    %4 = vector.load %arg3[%c0_2, %c0_3] : memref<2x1024xf32, #tpu.memory_space<vmem>>, vector<2x1024xf32>
    %5 = arith.subf %3, %4 : vector<2x1024xf32>
    %6 = arith.mulf %5, %5 : vector<2x1024xf32>
    %c0_4 = arith.constant 0 : index
    %c0_5 = arith.constant 0 : index
    %7 = vector.load %arg6[%c0_4, %c0_5] : memref<2x1024xf32, #tpu.memory_space<vmem>>, vector<2x1024xf32>
    %8 = arith.addf %7, %6 : vector<2x1024xf32>
    %c0_6 = arith.constant 0 : index
    %c0_7 = arith.constant 0 : index
    %9 = vector.load %arg6[%c0_6, %c0_7] : memref<2x1024xf32, #tpu.memory_space<vmem>>, vector<2x1024xf32>
    tpu.vector_store %arg6[%c0_6, %c0_7], %8 {strides = array<i32>} : memref<2x1024xf32, #tpu.memory_space<vmem>>, vector<2x1024xf32>,
    %c0_i32_8 = arith.constant 0 : i32
    %10 = arith.cmpi eq, %arg0, %c0_i32_8 : i32
    %11 = arith.extui %10 : i1 to i32
    %c0_i32_9 = arith.constant 0 : i32
    %12 = arith.cmpi ne, %11, %c0_i32_9 : i32
    scf.if %12 {
      %c0_11 = arith.constant 0 : index
      %c0_12 = arith.constant 0 : index
      %15 = vector.load %arg6[%c0_11, %c0_12] : memref<2x1024xf32, #tpu.memory_space<vmem>>, vector<2x1024xf32>
      %16 = vector.shape_cast %15 : vector<2x1024xf32> to vector<1x2x1024xf32>
      %cst = arith.constant dense<0.000000e+00> : vector<1xf32>
      %17 = vector.multi_reduction <add>, %16, %cst [1, 2] : vector<1x2x1024xf32> to vector<1xf32>
      %18 = vector.shape_cast %17 : vector<1xf32> to vector<1x1x1xf32>
      %19 = vector.extract %18[0, 0, 0] : f32 from vector<1x1x1xf32>
      %20 = vector.broadcast %19 : f32 to vector<1x1xf32>
      %c0_13 = arith.constant 0 : index
      %c0_14 = arith.constant 0 : index
      %c0_15 = arith.constant 0 : index
      %21 = vector.load %arg4[%c0_13, %c0_14, %c0_15] : memref<1x1x1xf32, #tpu.memory_space<vmem>>, vector<1x1x1xf32>
      %22 = vector.shape_cast %21 : vector<1x1x1xf32> to vector<1x1xf32>
      %23 = vector.shape_cast %20 : vector<1x1xf32> to vector<1x1x1xf32>
      tpu.vector_store %arg4[%c0_13, %c0_14, %c0_15], %23 {strides = array<i32>} : memref<1x1x1xf32, #tpu.memory_space<vmem>>, vector<1x1x1xf32>,
    } else {
    }
    %13 = arith.extui %10 : i1 to i32
    %c0_i32_10 = arith.constant 0 : i32
    %14 = arith.cmpi ne, %13, %c0_i32_10 : i32
    scf.if %14 {
      %c0_11 = arith.constant 0 : index
      %c0_12 = arith.constant 0 : index
      %c0_13 = arith.constant 0 : index
      %15 = vector.load %arg1[%c0_11, %c0_12, %c0_13] : memref<2x8x16xf32, #tpu.memory_space<vmem>>, vector<2x8x16xf32>
      %cst = arith.constant 1.000000e-07 : f32
      %16 = vector.broadcast %cst : f32 to vector<2x8x16xf32>
      %17 = arith.addf %15, %16 : vector<2x8x16xf32>
      %cst_14 = arith.constant 0.000000e+00 : f32
      %18 = vector.broadcast %cst_14 : f32 to vector<2x8x16xf32>
      %19 = arith.subf %18, %17 : vector<2x8x16xf32>
      %20 = math.log %17 : vector<2x8x16xf32>
      %21 = arith.mulf %19, %20 : vector<2x8x16xf32>
      %cst_15 = arith.constant dense<0.000000e+00> : vector<2x8xf32>
      %22 = vector.multi_reduction <add>, %21, %cst_15 [2] : vector<2x8x16xf32> to vector<2x8xf32>
      %cst_16 = arith.constant dense<0.000000e+00> : vector<2xf32>
      %23 = vector.multi_reduction <add>, %22, %cst_16 [1] : vector<2x8xf32> to vector<2xf32>
      %24 = vector.shape_cast %23 : vector<2xf32> to vector<2x1xf32>
      %cst_17 = arith.constant 1.250000e-01 : f32
      %25 = vector.broadcast %cst_17 : f32 to vector<2x1xf32>
      %26 = arith.mulf %24, %25 : vector<2x1xf32>
      %c0_18 = arith.constant 0 : index
      %c0_19 = arith.constant 0 : index
      %c0_20 = arith.constant 0 : index
      %27 = vector.load %arg5[%c0_18, %c0_19, %c0_20] : memref<1x2x1xf32, #tpu.memory_space<vmem>>, vector<1x2x1xf32>
      %28 = vector.shape_cast %27 : vector<1x2x1xf32> to vector<2x1xf32>
      %29 = vector.shape_cast %26 : vector<2x1xf32> to vector<1x2x1xf32>
      tpu.vector_store %arg5[%c0_18, %c0_19, %c0_20], %29 {strides = array<i32>} : memref<1x2x1xf32, #tpu.memory_space<vmem>>, vector<1x2x1xf32>,
    } else {
    }
    return
  }
  func.func @transform_0(%arg0: i32) -> (i32, i32, i32) {
    %c0_i32 = arith.constant 0 : i32
    %c0_i32_0 = arith.constant 0 : i32
    %c0_i32_1 = arith.constant 0 : i32
    %c0_i32_2 = arith.constant 0 : i32
    return %c0_i32, %c0_i32_0, %c0_i32_1 : i32, i32, i32
  }
  func.func @transform_1(%arg0: i32) -> (i32, i32) {
    %c0_i32 = arith.constant 0 : i32
    %c0_i32_0 = arith.constant 0 : i32
    return %arg0, %c0_i32 : i32, i32
  }
  func.func @transform_2(%arg0: i32) -> (i32, i32) {
    %c0_i32 = arith.constant 0 : i32
    %c0_i32_0 = arith.constant 0 : i32
    return %arg0, %c0_i32 : i32, i32
  }
  func.func @transform_3(%arg0: i32) -> (i32, i32, i32) {
    %c0_i32 = arith.constant 0 : i32
    %c0_i32_0 = arith.constant 0 : i32
    %c0_i32_1 = arith.constant 0 : i32
    %c0_i32_2 = arith.constant 0 : i32
    return %c0_i32, %c0_i32_0, %c0_i32_1 : i32, i32, i32
  }
  func.func @transform_4(%arg0: i32) -> (i32, i32, i32) {
    %c0_i32 = arith.constant 0 : i32
    %c0_i32_0 = arith.constant 0 : i32
    %c0_i32_1 = arith.constant 0 : i32
    %c0_i32_2 = arith.constant 0 : i32
    return %c0_i32, %c0_i32_0, %c0_i32_1 : i32, i32, i32
  }
}

</mosaic_0001>

<llo_original>
// kernel: tpu_custom_call.1
$region0: #{tpu_custom_call.1}
  #allocation0 [shape = 'u32[]', space=smem, size = 0x4, offset = 0x4, fixed_abs, tag = 'smem constant byte address 0x4 - core index']
  #allocation1 [shape = 'u32[72,128]{1,0:T(1,128)}', space=vmem, size = 0x9000, scoped, tag = 'internal scratch']
  #allocation2 [shape = 'f32[2,1024]{1,0:T(2,128)}', space=vmem, size = 0x2000, scoped, tag = 'scratch operand']
  %s0 = inlined_call_operand.hbm [shape: f32[2,8,16], index: 0, kind: input, shape index: {}]
  %s1 = inlined_call_operand.hbm [shape: f32[2,1024], index: 1, kind: input, shape index: {}]
  %s2 = inlined_call_operand.hbm [shape: f32[2,1024], index: 2, kind: input, shape index: {}]
  %s3 = inlined_call_operand.hbm [shape: f32[1,1,1], index: 3, kind: output, shape index: {0}]
  %s4 = inlined_call_operand.vmem [shape: f32[1,2,1], index: 4, kind: output, shape index: {1}]
  %5 = xla_tuple %s3, %s4
  %s6 = sld [smem:[#allocation0]]
  $region50: #{tpu_custom_call.1} parent=0
    _
  %s8 = ssub.s32 1, %s6
  %s9 = scalar_select 0, %s8, %s6
  $region1: #{tpu_custom_call.1} parent=0
    #allocation3 [shape = 'u8[8192]{0}', space=vmem, size = 0x2000, scoped, tag = 'input window, operand 0, single buffered']
    #allocation4 [shape = 's32[1]{0}', space=sflag, size = 0x4, scoped, tag = 'scoped memory for tpu_custom_call.1']
    #allocation5 [shape = 's32[1]{0}', space=sflag, size = 0x4, scoped, tag = 'scoped memory for tpu_custom_call.1']
    #allocation6 [shape = 'u8[8192]{0}', space=vmem, size = 0x2000, scoped, tag = 'input window, operand 1, single buffered']
    #allocation7 [shape = 's32[1]{0}', space=sflag, size = 0x4, scoped, tag = 'scoped memory for tpu_custom_call.1']
    #allocation8 [shape = 'u8[8192]{0}', space=vmem, size = 0x2000, scoped, tag = 'input window, operand 2, single buffered']
    #allocation9 [shape = 'u8[512]{0}', space=vmem, size = 0x400, scoped, tag = 'output window, operand 0, single buffered']
    %10 = vsyncpa [#allocation4], 0
    %11 = vsyncpa [#allocation7], 0
    %12 = vsyncpa [#allocation5], 0
    // Predicated region
    $region2: #{tpu_custom_call.1} parent=1 // pred_check
      _
    $region3: #{tpu_custom_call.1} parent=1 // pred_check_branch
      %14 = sbr.rel (0) target = $region5
    $region4: #{tpu_custom_call.1} parent=1 // pred_region
      %16 = vsyncadd [#allocation4], 0
      %s17 = sshll.u32 %s0, 4
      %s18 = int_to_ptr.hbm [resolvable:$true] %s17
      %s19 = sshll.u32 [#allocation3], 4
      %s20 = int_to_ptr.vmem [resolvable:$true] %s19
      %25 = dma.hbm_to_vmem [thread:$0]  %s18, 256, %s20, [#allocation4], 128, 128, 8
    $region5: #{tpu_custom_call.1} parent=1 // pred_fallthru
      _
    // Predicated region
    $region6: #{tpu_custom_call.1} parent=1 // pred_check
      _
    $region7: #{tpu_custom_call.1} parent=1 // pred_check_branch
      %27 = sbr.rel (0) target = $region9
    $region8: #{tpu_custom_call.1} parent=1 // pred_region
      %29 = vsyncadd [#allocation7], 0
      %s31 = sshll.u32 %s1, 4
      %s32 = int_to_ptr.hbm [resolvable:$true] %s31
      %s33 = sshll.u32 [#allocation6], 4
      %s34 = int_to_ptr.vmem [resolvable:$true] %s33
      %36 = dma.hbm_to_vmem [thread:$0]  %s32, 256, %s34, [#allocation7]
    $region9: #{tpu_custom_call.1} parent=1 // pred_fallthru
      _
    // Predicated region
    $region10: #{tpu_custom_call.1} parent=1 // pred_check
      _
    $region11: #{tpu_custom_call.1} parent=1 // pred_check_branch
      %38 = sbr.rel (0) target = $region13
    $region12: #{tpu_custom_call.1} parent=1 // pred_region
      %40 = vsyncadd [#allocation7], 0
      %s42 = sshll.u32 %s2, 4
      %s43 = int_to_ptr.hbm [resolvable:$true] %s42
      %s44 = sshll.u32 [#allocation8], 4
      %s45 = int_to_ptr.vmem [resolvable:$true] %s44
      %47 = dma.hbm_to_vmem [thread:$0]  %s43, 256, %s45, [#allocation7]
    $region13: #{tpu_custom_call.1} parent=1 // pred_fallthru
      _
    // Predicated region
    $region14: #{tpu_custom_call.1} parent=1 // pred_check
      _
    $region15: #{tpu_custom_call.1} parent=1 // pred_check_branch
      %49 = sbr.rel (0) target = $region17
    $region16: #{tpu_custom_call.1} parent=1 // pred_region
      %51 = dma.done [#allocation4], 256
    $region17: #{tpu_custom_call.1} parent=1 // pred_fallthru
      _
    // Predicated region
    $region18: #{tpu_custom_call.1} parent=1 // pred_check
      _
    $region19: #{tpu_custom_call.1} parent=1 // pred_check_branch
      %53 = sbr.rel (0) target = $region21
    $region20: #{tpu_custom_call.1} parent=1 // pred_region
      %55 = dma.done [#allocation7], 256
    $region21: #{tpu_custom_call.1} parent=1 // pred_fallthru
      _
    // Predicated region
    $region22: #{tpu_custom_call.1} parent=1 // pred_check
      _
    $region23: #{tpu_custom_call.1} parent=1 // pred_check_branch
      %57 = sbr.rel (0) target = $region25
    $region24: #{tpu_custom_call.1} parent=1 // pred_region
      %59 = dma.done [#allocation7], 256
    $region25: #{tpu_custom_call.1} parent=1 // pred_fallthru
      _
    %p60 = scmp.eq.s32.totalorder 0, 0
    // Predicated region
    $region26: #{tpu_custom_call.1} parent=1 // pred_check
      %p61 = pneg %p60
    $region27: #{tpu_custom_call.1} parent=1 // pred_check_branch
      %63 = sbr.rel (%p61) target = $region29
    $region28: #{tpu_custom_call.1} parent=1 // pred_region
      %64 = vst [vmem:[#allocation2] sm:$0xff] 0.0
      %65 = vst [vmem:[#allocation2 + $0x8] sm:$0xff] 0.0
    $region29: #{tpu_custom_call.1} parent=1 // pred_fallthru
      _
    %v66 = vld [vmem:[#allocation6] sm:$0xff]
    %v67 = vld [vmem:[#allocation6 + $0x8] sm:$0xff]
    %v68 = vld [vmem:[#allocation8] sm:$0xff]
    %v69 = vld [vmem:[#allocation8 + $0x8] sm:$0xff]
    %v70 = vsub.f32 %v66, %v68
    %v71 = vsub.f32 %v67, %v69
    %v72 = vmul.f32 %v70, %v70
    %v73 = vmul.f32 %v71, %v71
    %v74 = vld [vmem:[#allocation2] sm:$0xff]
    %v75 = vld [vmem:[#allocation2 + $0x8] sm:$0xff]
    %v76 = vadd.f32 %v74, %v72
    %v77 = vadd.f32 %v75, %v73
    %78 = vst [vmem:[#allocation2] sm:$0xff] %v76
    %79 = vst [vmem:[#allocation2 + $0x8] sm:$0xff] %v77
    // Predicated region
    $region30: #{tpu_custom_call.1} parent=1 // pred_check
      %p80 = pneg %p60
    $region31: #{tpu_custom_call.1} parent=1 // pred_check_branch
      %82 = sbr.rel (%p80) target = $region33
    $region32: #{tpu_custom_call.1} parent=1 // pred_region
      %v83 = vld [vmem:[#allocation2] sm:$0xff]
      %v84 = vld [vmem:[#allocation2 + $0x8] sm:$0xff]
      %87 = vst [vmem:[#allocation1] ss:$4 sm:$0xff] %v83
      %s88 = scalar_lea.vmem [#allocation1], 32
      %89 = vst [vmem:[%s88] ss:$4 sm:$0xff] %v84
      %v90 = vld.sshfl [vmem:[#allocation1] sm:$0xff pattern:$0x73625140]
      %v91 = vld.sshfl [vmem:[#allocation1 + $0x8] sm:$0xff pattern:$0x73625140]
      %v92 = vld.sshfl [vmem:[#allocation1 + $0x10] sm:$0xff pattern:$0x73625140]
      %v93 = vld.sshfl [vmem:[#allocation1 + $0x18] sm:$0xff pattern:$0x73625140]
      %v94 = vld.sshfl [vmem:[#allocation1 + $0x20] sm:$0xff pattern:$0x73625140]
      %v95 = vld.sshfl [vmem:[#allocation1 + $0x28] sm:$0xff pattern:$0x73625140]
      %v96 = vld.sshfl [vmem:[#allocation1 + $0x30] sm:$0xff pattern:$0x73625140]
      %v97 = vld.sshfl [vmem:[#allocation1 + $0x38] sm:$0xff pattern:$0x73625140]
      %vm106 = vcmask 1041408
      %v107 = vsel %vm106, %v90, 0.0
      %v108 = vsel %vm106, %v91, 0.0
      %v109 = vadd.f32 %v107, %v108
      %v110 = vsel %vm106, %v92, 0.0
      %v111 = vadd.f32 %v109, %v110
      %v112 = vsel %vm106, %v93, 0.0
      %v113 = vadd.f32 %v111, %v112
      %v114 = vsel %vm106, %v94, 0.0
      %v115 = vadd.f32 %v113, %v114
      %v116 = vsel %vm106, %v95, 0.0
      %v117 = vadd.f32 %v115, %v116
      %v118 = vsel %vm106, %v96, 0.0
      %v119 = vadd.f32 %v117, %v118
      %v120 = vsel %vm106, %v97, 0.0
      %v121 = vadd.f32 %v119, %v120
      %122 = vadd.xlane.f32.xlu0 %v121
      %v123 = vpop.xlane.xlu0 %122
      %v124 = vrot.slane %v123, 4
      %v125 = vadd.f32 %v123, %v124
      %v126 = vrot.slane %v125, 2
      %v127 = vadd.f32 %v125, %v126
      %v128 = vrot.slane %v127, 1
      %v129 = vadd.f32 %v127, %v128
      %s130 = vtos %v129
      %v131 = vstv %s130
      %vm132 = vcmask 0
      %133 = vst.msk [vmem:[#allocation9] sm:$0x1] %vm132, %v131
      %v134 = vld [vmem:[#allocation3] sm:$0xff]
      %v135 = vld [vmem:[#allocation3 + $0x8] sm:$0xff]
      %v136 = vadd.f32 %v134, 1e-07
      %v137 = vadd.f32 %v135, 1e-07
      %v138 = vsub.f32 0.0, %v136
      %v139 = vsub.f32 0.0, %v137
      %v140 = vlog2.pop %v136
      %v141 = vmul.f32 %v140, 0.6931472
      %v142 = vlog2.pop %v137
      %v143 = vmul.f32 %v142, 0.6931472
      %v144 = vmul.f32 %v138, %v141
      %v145 = vmul.f32 %v139, %v143
      %vm146 = vcmask 130048
      %v147 = vsel %vm146, %v144, 0.0
      %148 = vadd.xlane.f32.xlu0 %v147
      %v149 = vpop.xlane.xlu0 %148
      %v150 = vsel %vm146, %v145, 0.0
      %151 = vadd.xlane.f32.xlu0 %v150
      %v152 = vpop.xlane.xlu0 %151
      %v155 = vlaneseq
      %v156 = vand.u32 %v155, 127
      %v157 = vperm.slane %v149, %v156
      %v158 = vperm.slane %v152, %v156
      %vm159 = vcmask 1041409
      %v160 = vsel %vm159, %v158, %v157
      %vm162 = vcmask 58368
      %v163 = vsel %vm162, %v160, 0.0
      %164 = vadd.xlane.f32.xlu0 %v163
      %v165 = vpop.xlane.xlu0 %164
      %v166 = vmul.f32 %v165, 0.125
      %vm167 = vcmask 1024
      %168 = vst.msk [vmem:[%s4] sm:$0x3] %vm167, %v166
    $region33: #{tpu_custom_call.1} parent=1 // pred_fallthru
      _
    // Predicated region
    $region34: #{tpu_custom_call.1} parent=1 // pred_check
      _
    $region35: #{tpu_custom_call.1} parent=1 // pred_check_branch
      %170 = sbr.rel (0) target = $region37
    $region36: #{tpu_custom_call.1} parent=1 // pred_region
      %172 = vsyncadd [#allocation5], 0
      %s174 = sshll.u32 [#allocation9], 4
      %s175 = int_to_ptr.vmem [resolvable:$true] %s174
      %s176 = sshll.u32 %s3, 4
      %s177 = int_to_ptr.hbm [resolvable:$true] %s176
      %179 = dma.vmem_to_hbm [thread:$0]  %s175, 16, %s177, [#allocation5]
    $region37: #{tpu_custom_call.1} parent=1 // pred_fallthru
      _
    // Predicated region
    $region38: #{tpu_custom_call.1} parent=1 // pred_check
      _
    $region39: #{tpu_custom_call.1} parent=1 // pred_check_branch
      %181 = sbr.rel (0) target = $region41
    $region40: #{tpu_custom_call.1} parent=1 // pred_region
      _
    $region41: #{tpu_custom_call.1} parent=1 // pred_fallthru
      _
    // Predicated region
    $region42: #{tpu_custom_call.1} parent=1 // pred_check
      _
    $region43: #{tpu_custom_call.1} parent=1 // pred_check_branch
      %183 = sbr.rel (0) target = $region45
    $region44: #{tpu_custom_call.1} parent=1 // pred_region
      %185 = dma.done [#allocation5], 16
    $region45: #{tpu_custom_call.1} parent=1 // pred_fallthru
      _
    // Predicated region
    $region46: #{tpu_custom_call.1} parent=1 // pred_check
      _
    $region47: #{tpu_custom_call.1} parent=1 // pred_check_branch
      %187 = sbr.rel (0) target = $region49
    $region48: #{tpu_custom_call.1} parent=1 // pred_region
      _
    $region49: #{tpu_custom_call.1} parent=1 // pred_fallthru
      _
    %188 = vsyncpa [#allocation4], 1
    %189 = vsyncpa [#allocation7], 1
    %190 = vsyncpa [#allocation5], 1

</llo_original>
